<compile_context>
chip_gen: v7x
topology: tpu7x:2x2x1
jax: 0.10.0
libtpu: 0.0.40
codegen_flags: <defaults>
</compile_context>

<pallas_src>
import functools

import jax
import jax.numpy as jnp
from jax import lax
from jax.experimental import pallas as pl
from jax.experimental.pallas import tpu as pltpu

EPS = 1e-5        # nn.InstanceNorm2d default eps
NEG_SLOPE = 0.2   # nn.LeakyReLU(negative_slope=0.2)


def _same_pad(k, s):
    """Conv2dSame padding -> (top, bottom, left, right)."""
    if (k - s) % 2 == 0:
        p = (k - s) // 2
        return p, p, p, p
    left = (k - s) // 2
    return left, left + 1, left, left + 1


@functools.partial(jax.jit, static_argnames=("kernel_size", "stride"))
def encode_block(x_nchw, weight, bias, *, kernel_size, stride):
    """x_nchw: (N, Cin, H, W); weight: (Cout, Cin, K, K); bias: (Cout,).

    Returns (N, Cout, Hout, Wout), matching PyTorch EncodeBlock.forward.
    `bias` is accepted for API parity but is mathematically cancelled by the
    mean subtraction of InstanceNorm2d(affine=False), so it is unused.
    """
    del bias
    N, Cin, H, W = x_nchw.shape
    Cout = weight.shape[0]
    K, S = kernel_size, stride

    pad_t, pad_b, pad_l, pad_r = _same_pad(K, S)
    Hout = (H + pad_t + pad_b - K) // S + 1
    Wout = (W + pad_l + pad_r - K) // S + 1
    P = Hout * Wout
    NP = N * P

    # ---------- wrapper-side layout plumbing (fused by XLA) ----------
    # Repack the padded NHWC input as (N, HB, WB, S*S*Cin) where
    # h = S*hb + hr, w = S*wb + wr and the last dim holds (hr, wr, ci).
    # Every conv tap group then becomes a unit-stride static slice in VMEM.
    TB = (K - 1) // S + 1          # tap-block offsets per spatial dim (2 for K=3,S=2)
    HB = Hout + TB - 1
    WB = Wout + TB - 1
    Hp, Wp = S * HB, S * WB
    SSC = S * S * Cin

    x_nhwc = jnp.transpose(x_nchw, (0, 2, 3, 1)).astype(jnp.float32)
    x_pad = jnp.pad(
        x_nhwc,
        ((0, 0), (pad_t, Hp - H - pad_t), (pad_l, Wp - W - pad_l), (0, 0)))
    x_r = x_pad.reshape(N, HB, S, WB, S, Cin)
    x_r = jnp.transpose(x_r, (0, 1, 3, 2, 4, 5)).reshape(N, HB, WB, SSC)

    # Weight regrouped the same way: (TB*TB, S*S*Cin, Cout); taps that fall
    # outside the KxK window are zero-padded (their products vanish).
    w_hwio = jnp.transpose(weight, (2, 3, 1, 0)).astype(jnp.float32)   # (K,K,Cin,Cout)
    w_pad = jnp.pad(w_hwio, ((0, TB * S - K), (0, TB * S - K), (0, 0), (0, 0)))
    w_r = w_pad.reshape(TB, S, TB, S, Cin, Cout)
    w_r = jnp.transpose(w_r, (0, 2, 1, 3, 4, 5)).reshape(TB * TB, SSC, Cout)

    def kernel(x_ref, w_ref, o_ref):
        x = x_ref[...]                                   # (N, HB, WB, S*S*Cin)
        # im2col + conv: TB*TB unit-stride tap slices, each one MXU matmul.
        acc = None
        for hb0 in range(TB):
            for wb0 in range(TB):
                tap = x[:, hb0:hb0 + Hout, wb0:wb0 + Wout, :]
                tap = tap.reshape(NP, SSC)               # leading-dim collapse only
                d = jnp.dot(tap, w_ref[hb0 * TB + wb0],
                            preferred_element_type=jnp.float32)
                acc = d if acc is None else acc + d
        # InstanceNorm2d (affine=False): per-sample, per-channel stats over the
        # full spatial extent (all of P is in this block, so stats are exact).
        y = acc.reshape(N, P, Cout)
        mean = jnp.mean(y, axis=1, keepdims=True)
        var = jnp.mean(jnp.square(y - mean), axis=1, keepdims=True)
        y = (y - mean) * lax.rsqrt(var + EPS)
        # LeakyReLU(0.2)
        y = jnp.where(y >= 0, y, NEG_SLOPE * y)
        # Lane-dense store: (Cout, N*P) = (8, 128) -> one full-width unmasked vst.
        o_ref[...] = jnp.transpose(y.reshape(NP, Cout), (1, 0)).astype(o_ref.dtype)

    out = pl.pallas_call(
        kernel,
        out_shape=jax.ShapeDtypeStruct((Cout, NP), jnp.float32),
        grid=(1,),
        in_specs=[
            pl.BlockSpec((N, HB, WB, SSC), lambda i: (0, 0, 0, 0)),
            pl.BlockSpec((TB * TB, SSC, Cout), lambda i: (0, 0, 0)),
        ],
        out_specs=pl.BlockSpec((Cout, NP), lambda i: (0, 0)),
        compiler_params=pltpu.CompilerParams(
            dimension_semantics=("arbitrary",)),
    )(x_r, w_r)

    # TODO(synk): for large spatial sizes, tile P with an extra grid axis plus
    # sum / sum-of-squares scratch accumulators (pl.when finalize) so blocks fit
    # v7x's 64 MiB VMEM, and cast the matmul operands to bf16 (keep f32 stats).

    # (Cout, N*P) -> (N, Cout, Hout, Wout)
    out = out.reshape(Cout, N, Hout, Wout)
    return jnp.transpose(out, (1, 0, 2, 3))


def _reference(x_nchw, weight, bias, kernel_size, stride):
    """Plain-JAX reference of the PyTorch forward (conv WITH bias, norm, act)."""
    K, S = kernel_size, stride
    pad_t, pad_b, pad_l, pad_r = _same_pad(K, S)
    x_nhwc = jnp.transpose(x_nchw, (0, 2, 3, 1)).astype(jnp.float32)
    w_hwio = jnp.transpose(weight, (2, 3, 1, 0)).astype(jnp.float32)
    y = lax.conv_general_dilated(
        x_nhwc, w_hwio, window_strides=(S, S),
        padding=((pad_t, pad_b), (pad_l, pad_r)),
        dimension_numbers=("NHWC", "HWIO", "NHWC"))
    y = y + bias.reshape(1, 1, 1, -1)
    mean = jnp.mean(y, axis=(1, 2), keepdims=True)
    var = jnp.mean((y - mean) ** 2, axis=(1, 2), keepdims=True)
    y = (y - mean) * lax.rsqrt(var + EPS)
    y = jnp.where(y >= 0, y, NEG_SLOPE * y)
    return jnp.transpose(y, (0, 3, 1, 2))


if __name__ == "__main__":
    # Small deterministic problem: N=2, Cin=4, H=W=16, Cout=8, k=3, stride=2.
    N, Cin, H, W = 2, 4, 16, 16
    Cout, K, S = 8, 3, 2

    key = jax.random.PRNGKey(0)
    kx, kw, kb = jax.random.split(key, 3)
    x = jax.random.normal(kx, (N, Cin, H, W), dtype=jnp.float32)
    fan_in = Cin * K * K
    bound = 1.0 / (fan_in ** 0.5)
    weight = jax.random.uniform(kw, (Cout, Cin, K, K), jnp.float32, -bound, bound)
    bias = jax.random.uniform(kb, (Cout,), jnp.float32, -bound, bound)

    out = jax.block_until_ready(encode_block(x, weight, bias, kernel_size=K, stride=S))
    ref = jax.block_until_ready(_reference(x, weight, bias, K, S))

    assert out.shape == (N, Cout, H // S, W // S), out.shape
    assert jnp.allclose(out, ref, atol=1e-4, rtol=1e-4), float(jnp.max(jnp.abs(out - ref)))

    print("KERNEL_OK")
</pallas_src>

<mosaic_0001>
module attributes {stable_mosaic.version = 11 : i64} {
  func.func @kernel(%arg0: i32, %arg1: memref<2x9x9x16xf32, #tpu.memory_space<vmem>>, %arg2: memref<4x16x8xf32, #tpu.memory_space<vmem>>, %arg3: memref<8x128xf32, #tpu.memory_space<vmem>>) attributes {dimension_semantics = [#tpu.dimension_semantics<arbitrary>], iteration_bounds = array<i64: 1>, scalar_prefetch = 0 : i64, scratch_operands = 0 : i64, tpu.core_type = #tpu.core_type<tc>, window_params = [{pipeline_mode = #tpu.pipeline_mode<synchronous>, transform_indices = @transform_0, window_bounds = array<i64: 2, 9, 9, 16>}, {pipeline_mode = #tpu.pipeline_mode<synchronous>, transform_indices = @transform_1, window_bounds = array<i64: 4, 16, 8>}, {pipeline_mode = #tpu.pipeline_mode<synchronous>, transform_indices = @transform_2, window_bounds = array<i64: 8, 128>}]} {
    %c0 = arith.constant 0 : index
    %c0_0 = arith.constant 0 : index
    %c0_1 = arith.constant 0 : index
    %c0_2 = arith.constant 0 : index
    %0 = vector.load %arg1[%c0, %c0_0, %c0_1, %c0_2] : memref<2x9x9x16xf32, #tpu.memory_space<vmem>>, vector<2x9x9x16xf32>
    %1 = vector.extract_strided_slice %0 {offsets = [0, 0, 0, 0], sizes = [2, 8, 8, 16], strides = [1, 1, 1, 1]} : vector<2x9x9x16xf32> to vector<2x8x8x16xf32>
    %2 = vector.shape_cast %1 : vector<2x8x8x16xf32> to vector<128x16xf32>
    %c0_3 = arith.constant 0 : index
    %c0_4 = arith.constant 0 : index
    %c0_5 = arith.constant 0 : index
    %3 = vector.load %arg2[%c0_3, %c0_4, %c0_5] : memref<4x16x8xf32, #tpu.memory_space<vmem>>, vector<1x16x8xf32>
    %4 = vector.shape_cast %3 : vector<1x16x8xf32> to vector<16x8xf32>
    %cst = arith.constant dense<0.000000e+00> : vector<128x8xf32>
    %5 = tpu.matmul %2, %4, %cst {dimension_numbers = #tpu.dot_dimension_numbers<[1], [0], [0], [1], [0, 0, 1, 1], [], []>} : vector<128x16xf32>, vector<16x8xf32>, vector<128x8xf32> -> vector<128x8xf32>
    %6 = vector.extract_strided_slice %0 {offsets = [0, 0, 1, 0], sizes = [2, 8, 8, 16], strides = [1, 1, 1, 1]} : vector<2x9x9x16xf32> to vector<2x8x8x16xf32>
    %7 = vector.shape_cast %6 : vector<2x8x8x16xf32> to vector<128x16xf32>
    %c1 = arith.constant 1 : index
    %c0_6 = arith.constant 0 : index
    %c0_7 = arith.constant 0 : index
    %8 = vector.load %arg2[%c1, %c0_6, %c0_7] : memref<4x16x8xf32, #tpu.memory_space<vmem>>, vector<1x16x8xf32>
    %9 = vector.shape_cast %8 : vector<1x16x8xf32> to vector<16x8xf32>
    %cst_8 = arith.constant dense<0.000000e+00> : vector<128x8xf32>
    %10 = tpu.matmul %7, %9, %cst_8 {dimension_numbers = #tpu.dot_dimension_numbers<[1], [0], [0], [1], [0, 0, 1, 1], [], []>} : vector<128x16xf32>, vector<16x8xf32>, vector<128x8xf32> -> vector<128x8xf32>
    %11 = arith.addf %5, %10 : vector<128x8xf32>
    %12 = vector.extract_strided_slice %0 {offsets = [0, 1, 0, 0], sizes = [2, 8, 8, 16], strides = [1, 1, 1, 1]} : vector<2x9x9x16xf32> to vector<2x8x8x16xf32>
    %13 = vector.shape_cast %12 : vector<2x8x8x16xf32> to vector<128x16xf32>
    %c2 = arith.constant 2 : index
    %c0_9 = arith.constant 0 : index
    %c0_10 = arith.constant 0 : index
    %14 = vector.load %arg2[%c2, %c0_9, %c0_10] : memref<4x16x8xf32, #tpu.memory_space<vmem>>, vector<1x16x8xf32>
    %15 = vector.shape_cast %14 : vector<1x16x8xf32> to vector<16x8xf32>
    %cst_11 = arith.constant dense<0.000000e+00> : vector<128x8xf32>
    %16 = tpu.matmul %13, %15, %cst_11 {dimension_numbers = #tpu.dot_dimension_numbers<[1], [0], [0], [1], [0, 0, 1, 1], [], []>} : vector<128x16xf32>, vector<16x8xf32>, vector<128x8xf32> -> vector<128x8xf32>
    %17 = arith.addf %11, %16 : vector<128x8xf32>
    %18 = vector.extract_strided_slice %0 {offsets = [0, 1, 1, 0], sizes = [2, 8, 8, 16], strides = [1, 1, 1, 1]} : vector<2x9x9x16xf32> to vector<2x8x8x16xf32>
    %19 = vector.shape_cast %18 : vector<2x8x8x16xf32> to vector<128x16xf32>
    %c3 = arith.constant 3 : index
    %c0_12 = arith.constant 0 : index
    %c0_13 = arith.constant 0 : index
    %20 = vector.load %arg2[%c3, %c0_12, %c0_13] : memref<4x16x8xf32, #tpu.memory_space<vmem>>, vector<1x16x8xf32>
    %21 = vector.shape_cast %20 : vector<1x16x8xf32> to vector<16x8xf32>
    %cst_14 = arith.constant dense<0.000000e+00> : vector<128x8xf32>
    %22 = tpu.matmul %19, %21, %cst_14 {dimension_numbers = #tpu.dot_dimension_numbers<[1], [0], [0], [1], [0, 0, 1, 1], [], []>} : vector<128x16xf32>, vector<16x8xf32>, vector<128x8xf32> -> vector<128x8xf32>
    %23 = arith.addf %17, %22 : vector<128x8xf32>
    %24 = vector.shape_cast %23 : vector<128x8xf32> to vector<2x64x8xf32>
    %cst_15 = arith.constant dense<0.000000e+00> : vector<2x8xf32>
    %25 = vector.multi_reduction <add>, %24, %cst_15 [1] : vector<2x64x8xf32> to vector<2x8xf32>
    %26 = vector.shape_cast %25 : vector<2x8xf32> to vector<2x1x8xf32>
    %cst_16 = arith.constant 6.400000e+01 : f32
    %27 = vector.broadcast %cst_16 : f32 to vector<2x1x8xf32>
    %28 = arith.divf %26, %27 : vector<2x1x8xf32>
    %29 = vector.broadcast %28 : vector<2x1x8xf32> to vector<2x64x8xf32>
    %30 = arith.subf %24, %29 : vector<2x64x8xf32>
    %31 = arith.mulf %30, %30 : vector<2x64x8xf32>
    %cst_17 = arith.constant dense<0.000000e+00> : vector<2x8xf32>
    %32 = vector.multi_reduction <add>, %31, %cst_17 [1] : vector<2x64x8xf32> to vector<2x8xf32>
    %33 = vector.shape_cast %32 : vector<2x8xf32> to vector<2x1x8xf32>
    %cst_18 = arith.constant 6.400000e+01 : f32
    %34 = vector.broadcast %cst_18 : f32 to vector<2x1x8xf32>
    %35 = arith.divf %33, %34 : vector<2x1x8xf32>
    %36 = vector.broadcast %28 : vector<2x1x8xf32> to vector<2x64x8xf32>
    %37 = arith.subf %24, %36 : vector<2x64x8xf32>
    %cst_19 = arith.constant 9.99999974E-6 : f32
    %38 = vector.broadcast %cst_19 : f32 to vector<2x1x8xf32>
    %39 = arith.addf %35, %38 : vector<2x1x8xf32>
    %40 = math.rsqrt %39 : vector<2x1x8xf32>
    %41 = vector.broadcast %40 : vector<2x1x8xf32> to vector<2x64x8xf32>
    %42 = arith.mulf %37, %41 : vector<2x64x8xf32>
    %cst_20 = arith.constant 0.000000e+00 : f32
    %43 = vector.broadcast %cst_20 : f32 to vector<2x64x8xf32>
    %44 = arith.cmpf oge, %42, %43 : vector<2x64x8xf32>
    %cst_21 = arith.constant 2.000000e-01 : f32
    %45 = vector.broadcast %cst_21 : f32 to vector<2x64x8xf32>
    %46 = arith.mulf %45, %42 : vector<2x64x8xf32>
    %47 = arith.select %44, %42, %46 : vector<2x64x8xi1>, vector<2x64x8xf32>
    %48 = vector.shape_cast %47 : vector<2x64x8xf32> to vector<128x8xf32>
    %49 = tpu.transpose %48, [1, 0] : vector<128x8xf32> -> vector<8x128xf32>
    %c0_22 = arith.constant 0 : index
    %c0_23 = arith.constant 0 : index
    %50 = vector.load %arg3[%c0_22, %c0_23] : memref<8x128xf32, #tpu.memory_space<vmem>>, vector<8x128xf32>
    tpu.vector_store %arg3[%c0_22, %c0_23], %49 {strides = array<i32>} : memref<8x128xf32, #tpu.memory_space<vmem>>, vector<8x128xf32>,
    return
  }
  func.func @transform_0(%arg0: i32) -> (i32, i32, i32, i32) {
    %c0_i32 = arith.constant 0 : i32
    %c0_i32_0 = arith.constant 0 : i32
    %c0_i32_1 = arith.constant 0 : i32
    %c0_i32_2 = arith.constant 0 : i32
    %c0_i32_3 = arith.constant 0 : i32
    return %c0_i32, %c0_i32_0, %c0_i32_1, %c0_i32_2 : i32, i32, i32, i32
  }
  func.func @transform_1(%arg0: i32) -> (i32, i32, i32) {
    %c0_i32 = arith.constant 0 : i32
    %c0_i32_0 = arith.constant 0 : i32
    %c0_i32_1 = arith.constant 0 : i32
    %c0_i32_2 = arith.constant 0 : i32
    return %c0_i32, %c0_i32_0, %c0_i32_1 : i32, i32, i32
  }
  func.func @transform_2(%arg0: i32) -> (i32, i32) {
    %c0_i32 = arith.constant 0 : i32
    %c0_i32_0 = arith.constant 0 : i32
    %c0_i32_1 = arith.constant 0 : i32
    return %c0_i32, %c0_i32_0 : i32, i32
  }
}

</mosaic_0001>

<llo_original>
// kernel: encode_block.1
$region0: #{encode_block.1}
  #allocation0 [shape = 'u32[]', space=smem, size = 0x4, offset = 0x4, fixed_abs, tag = 'smem constant byte address 0x4 - core index']
  #allocation1 [shape = 'u32[144,128]{1,0:T(1,128)}', space=vmem, size = 0x12000, scoped, tag = 'internal scratch']
  %s0 = inlined_call_operand.vmem [shape: f32[2,9,9,16], index: 0, kind: input, shape index: {}]
  %s1 = inlined_call_operand.vmem [shape: f32[4,16,8], index: 1, kind: input, shape index: {}]
  %s2 = inlined_call_operand.vmem [shape: f32[8,128], index: 2, kind: output, shape index: {}]
  %s3 = sld [smem:[#allocation0]]
  $region18: #{encode_block.1} parent=0
    _
  %s5 = ssub.s32 1, %s3
  %s6 = scalar_select 0, %s5, %s3
  // Predicated region
  $region2: #{encode_block.1} parent=0 // pred_check
    _
  $region3: #{encode_block.1} parent=0 // pred_check_branch
    %8 = sbr.rel (0) target = $region5
  $region4: #{encode_block.1} parent=0 // pred_region
    _
  $region5: #{encode_block.1} parent=0 // pred_fallthru
    _
  // Predicated region
  $region6: #{encode_block.1} parent=0 // pred_check
    _
  $region7: #{encode_block.1} parent=0 // pred_check_branch
    %10 = sbr.rel (0) target = $region9
  $region8: #{encode_block.1} parent=0 // pred_region
    _
  $region9: #{encode_block.1} parent=0 // pred_fallthru
    _
  %v11 = vld [vmem:[%s0] sm:$0xff]
  %v12 = vld [vmem:[%s0 + $0x8] sm:$0x1]
  %v13 = vld [vmem:[%s0 + $0x10] sm:$0xff]
  %v14 = vld [vmem:[%s0 + $0x18] sm:$0x1]
  %v15 = vld [vmem:[%s0 + $0x20] sm:$0xff]
  %v16 = vld [vmem:[%s0 + $0x28] sm:$0x1]
  %v17 = vld [vmem:[%s0 + $0x30] sm:$0xff]
  %v18 = vld [vmem:[%s0 + $0x38] sm:$0x1]
  %v19 = vld [vmem:[%s0 + $0x40] sm:$0xff]
  %v20 = vld [vmem:[%s0 + $0x48] sm:$0x1]
  %v21 = vld [vmem:[%s0 + $0x50] sm:$0xff]
  %v22 = vld [vmem:[%s0 + $0x58] sm:$0x1]
  %v23 = vld [vmem:[%s0 + $0x60] sm:$0xff]
  %v24 = vld [vmem:[%s0 + $0x68] sm:$0x1]
  %v25 = vld [vmem:[%s0 + $0x70] sm:$0xff]
  %v26 = vld [vmem:[%s0 + $0x78] sm:$0x1]
  %v27 = vld [vmem:[%s0 + $0x80] sm:$0xff]
  %v28 = vld [vmem:[%s0 + $0x88] sm:$0x1]
  %v29 = vld [vmem:[%s0 + $0x90] sm:$0xff]
  %v30 = vld [vmem:[%s0 + $0x98] sm:$0x1]
  %v31 = vld [vmem:[%s0 + $0xa0] sm:$0xff]
  %v32 = vld [vmem:[%s0 + $0xa8] sm:$0x1]
  %v33 = vld [vmem:[%s0 + $0xb0] sm:$0xff]
  %v34 = vld [vmem:[%s0 + $0xb8] sm:$0x1]
  %v35 = vld [vmem:[%s0 + $0xc0] sm:$0xff]
  %v36 = vld [vmem:[%s0 + $0xc8] sm:$0x1]
  %v37 = vld [vmem:[%s0 + $0xd0] sm:$0xff]
  %v38 = vld [vmem:[%s0 + $0xd8] sm:$0x1]
  %v39 = vld [vmem:[%s0 + $0xe0] sm:$0xff]
  %v40 = vld [vmem:[%s0 + $0xe8] sm:$0x1]
  %v41 = vld [vmem:[%s0 + $0xf0] sm:$0xff]
  %v42 = vld [vmem:[%s0 + $0xf8] sm:$0x1]
  %v43 = vld [vmem:[%s0 + $0x100] sm:$0xff]
  %v44 = vld [vmem:[%s0 + $0x108] sm:$0x1]
  %v45 = vld [vmem:[%s0 + $0x110] sm:$0xff]
  %v46 = vld [vmem:[%s0 + $0x118] sm:$0x1]
  %v47 = vld [vmem:[%s1] sm:$0xff]
  %v48 = vld [vmem:[%s1 + $0x8] sm:$0xff]
  %vm81 = vcmask 1046528
  %v82 = vrot.slane %v11, 1
  %v83 = vrot.slane %v12, 1
  %v84 = vsel %vm81, %v82, %v83
  %v85 = vrot.slane %v13, 1
  %v86 = vrot.slane %v14, 1
  %v87 = vsel %vm81, %v85, %v86
  %v88 = vrot.slane %v15, 1
  %v89 = vrot.slane %v16, 1
  %v90 = vsel %vm81, %v88, %v89
  %v91 = vrot.slane %v17, 1
  %v92 = vrot.slane %v18, 1
  %v93 = vsel %vm81, %v91, %v92
  %v94 = vrot.slane %v19, 1
  %v95 = vrot.slane %v20, 1
  %v96 = vsel %vm81, %v94, %v95
  %v97 = vrot.slane %v21, 1
  %v98 = vrot.slane %v22, 1
  %v99 = vsel %vm81, %v97, %v98
  %v100 = vrot.slane %v23, 1
  %v101 = vrot.slane %v24, 1
  %v102 = vsel %vm81, %v100, %v101
  %v103 = vrot.slane %v25, 1
  %v104 = vrot.slane %v26, 1
  %v105 = vsel %vm81, %v103, %v104
  %v106 = vrot.slane %v29, 1
  %v107 = vrot.slane %v30, 1
  %v108 = vsel %vm81, %v106, %v107
  %v109 = vrot.slane %v31, 1
  %v110 = vrot.slane %v32, 1
  %v111 = vsel %vm81, %v109, %v110
  %v112 = vrot.slane %v33, 1
  %v113 = vrot.slane %v34, 1
  %v114 = vsel %vm81, %v112, %v113
  %v115 = vrot.slane %v35, 1
  %v116 = vrot.slane %v36, 1
  %v117 = vsel %vm81, %v115, %v116
  %v118 = vrot.slane %v37, 1
  %v119 = vrot.slane %v38, 1
  %v120 = vsel %vm81, %v118, %v119
  %v121 = vrot.slane %v39, 1
  %v122 = vrot.slane %v40, 1
  %v123 = vsel %vm81, %v121, %v122
  %v124 = vrot.slane %v41, 1
  %v125 = vrot.slane %v42, 1
  %v126 = vsel %vm81, %v124, %v125
  %v127 = vrot.slane %v43, 1
  %v128 = vrot.slane %v44, 1
  %v129 = vsel %vm81, %v127, %v128
  %s130 = scalar_lea.vmem %s1, 16
  %v131 = vld [vmem:[%s130] sm:$0xff]
  %v132 = vld [vmem:[%s130 + $0x8] sm:$0xff]
  %vm133 = vcmask 130048
  %v134 = vsel %vm133, %v84, 0
  %v136 = vsel %vm133, %v87, 0
  %v138 = vsel %vm133, %v90, 0
  %v140 = vsel %vm133, %v93, 0
  %v142 = vsel %vm133, %v96, 0
  %v144 = vsel %vm133, %v99, 0
  %v146 = vsel %vm133, %v102, 0
  %v148 = vsel %vm133, %v105, 0
  %v150 = vsel %vm133, %v108, 0
  %v152 = vsel %vm133, %v111, 0
  %v154 = vsel %vm133, %v114, 0
  %v156 = vsel %vm133, %v117, 0
  %v158 = vsel %vm133, %v120, 0
  %v160 = vsel %vm133, %v123, 0
  %v162 = vsel %vm133, %v126, 0
  %v164 = vsel %vm133, %v129, 0
  %166 = vmatprep.subr.mxu0 0.0
  %167 = vmatpush1.msra.mxu0 %v131
  %168 = vmatprep.subr.mxu0 0.0
  %169 = vmatpush1.msra.mxu0 %v132
  %170 = vmatprep.subr.mxu0 0.0
  %171 = vmatpush1.msra.mxu0 0.0
  %172 = vmatprep.subr.mxu0 0.0
  %173 = vmatpush1.msra.mxu0 0.0
  %174 = vmatprep.subr.mxu0 0.0
  %175 = vmatpush1.msra.mxu0 0.0
  %176 = vmatprep.subr.mxu0 0.0
  %177 = vmatpush1.msra.mxu0 0.0
  %178 = vmatprep.subr.mxu0 0.0
  %179 = vmatpush1.msra.mxu0 0.0
  %180 = vmatprep.subr.mxu0 0.0
  %181 = vmatpush1.msra.mxu0 0.0
  %182 = vmatprep.subr.mxu0 0.0
  %183 = vmatpush1.msra.mxu0 0.0
  %184 = vmatprep.subr.mxu0 0.0
  %185 = vmatpush1.msra.mxu0 0.0
  %186 = vmatprep.subr.mxu0 0.0
  %187 = vmatpush1.msra.mxu0 0.0
  %188 = vmatprep.subr.mxu0 0.0
  %189 = vmatpush1.msra.mxu0 0.0
  %190 = vmatprep.subr.mxu0 0.0
  %191 = vmatpush1.msra.mxu0 0.0
  %192 = vmatprep.subr.mxu0 0.0
  %193 = vmatpush1.msra.mxu0 0.0
  %194 = vmatprep.subr.mxu0 0.0
  %195 = vmatpush1.msra.mxu0 0.0
  %196 = vmatprep.subr.mxu0 0.0
  %197 = vmatpush1.msra.mxu0 0.0
  %198 = vmatprep.subr.mxu0 0.0
  %199 = vmatpush1.msra.mxu0 0.0
  %200 = vmatprep.subr.mxu0 0.0
  %201 = vmatpush1.msra.mxu0 0.0
  %202 = vmatprep.subr.mxu0 0.0
  %203 = vmatpush1.msra.mxu0 0.0
  %204 = vmatprep.subr.mxu0 0.0
  %205 = vmatpush1.msra.mxu0 0.0
  %206 = vmatprep.subr.mxu0 0.0
  %207 = vmatpush1.msra.mxu0 0.0
  %208 = vmatprep.subr.mxu0 0.0
  %209 = vmatpush1.msra.mxu0 0.0
  %210 = vmatprep.subr.mxu0 0.0
  %211 = vmatpush1.msra.mxu0 0.0
  %212 = vmatprep.subr.mxu0 0.0
  %213 = vmatpush1.msra.mxu0 0.0
  %214 = vmatprep.subr.mxu0 0.0
  %215 = vmatpush1.msra.mxu0 0.0
  %216 = vmatprep.subr.mxu0 0.0
  %217 = vmatpush1.msra.mxu0 0.0
  %218 = vmatprep.subr.mxu0 0.0
  %219 = vmatpush1.msra.mxu0 0.0
  %220 = vmatprep.subr.mxu0 0.0
  %221 = vmatpush1.msra.mxu0 0.0
  %222 = vmatprep.subr.mxu0 0.0
  %223 = vmatpush1.msra.mxu0 0.0
  %224 = vmatprep.subr.mxu0 0.0
  %225 = vmatpush1.msra.mxu0 0.0
  %226 = vmatprep.subr.mxu0 0.0
  %227 = vmatpush1.msra.mxu0 0.0
  %228 = vmatprep.subr.mxu0 0.0
  %229 = vmatpush1.msra.mxu0 0.0
  %230 = vmatprep.mubr.f32.mxu0 0.0
  %231 = vmatmul.mubr.f32.gmra.mrb[0].mxu0 %v134
  %v232 = vpop.f32.mrb[0].mxu0
  %v233 = vadd.f32 0.0, %v232
  %v234 = vpop.f32.mrb[0].mxu0
  %235 = vmatprep.mubr.f32.mxu0 0.0
  %236 = vmatmul.mubr.f32.gmra.mrb[0].mxu0 %v136
  %v237 = vpop.f32.mrb[0].mxu0
  %v238 = vadd.f32 0.0, %v237
  %v239 = vpop.f32.mrb[0].mxu0
  %240 = vmatprep.mubr.f32.mxu0 0.0
  %241 = vmatmul.mubr.f32.gmra.mrb[0].mxu0 %v138
  %v242 = vpop.f32.mrb[0].mxu0
  %v243 = vadd.f32 0.0, %v242
  %v244 = vpop.f32.mrb[0].mxu0
  %245 = vmatprep.mubr.f32.mxu0 0.0
  %246 = vmatmul.mubr.f32.gmra.mrb[0].mxu0 %v140
  %v247 = vpop.f32.mrb[0].mxu0
  %v248 = vadd.f32 0.0, %v247
  %v249 = vpop.f32.mrb[0].mxu0
  %250 = vmatprep.mubr.f32.mxu0 0.0
  %251 = vmatmul.mubr.f32.gmra.mrb[0].mxu0 %v142
  %v252 = vpop.f32.mrb[0].mxu0
  %v253 = vadd.f32 0.0, %v252
  %v254 = vpop.f32.mrb[0].mxu0
  %255 = vmatprep.mubr.f32.mxu0 0.0
  %256 = vmatmul.mubr.f32.gmra.mrb[0].mxu0 %v144
  %v257 = vpop.f32.mrb[0].mxu0
  %v258 = vadd.f32 0.0, %v257
  %v259 = vpop.f32.mrb[0].mxu0
  %260 = vmatprep.mubr.f32.mxu0 0.0
  %261 = vmatmul.mubr.f32.gmra.mrb[0].mxu0 %v146
  %v262 = vpop.f32.mrb[0].mxu0
  %v263 = vadd.f32 0.0, %v262
  %v264 = vpop.f32.mrb[0].mxu0
  %265 = vmatprep.mubr.f32.mxu0 0.0
  %266 = vmatmul.mubr.f32.gmra.mrb[0].mxu0 %v148
  %v267 = vpop.f32.mrb[0].mxu0
  %v268 = vadd.f32 0.0, %v267
  %v269 = vpop.f32.mrb[0].mxu0
  %270 = vmatprep.mubr.f32.mxu0 0.0
  %271 = vmatmul.mubr.f32.gmra.mrb[0].mxu0 %v150
  %v272 = vpop.f32.mrb[0].mxu0
  %v273 = vadd.f32 0.0, %v272
  %v274 = vpop.f32.mrb[0].mxu0
  %275 = vmatprep.mubr.f32.mxu0 0.0
  %276 = vmatmul.mubr.f32.gmra.mrb[0].mxu0 %v152
  %v277 = vpop.f32.mrb[0].mxu0
  %v278 = vadd.f32 0.0, %v277
  %v279 = vpop.f32.mrb[0].mxu0
  %280 = vmatprep.mubr.f32.mxu0 0.0
  %281 = vmatmul.mubr.f32.gmra.mrb[0].mxu0 %v154
  %v282 = vpop.f32.mrb[0].mxu0
  %v283 = vadd.f32 0.0, %v282
  %v284 = vpop.f32.mrb[0].mxu0
  %285 = vmatprep.mubr.f32.mxu0 0.0
  %286 = vmatmul.mubr.f32.gmra.mrb[0].mxu0 %v156
  %v287 = vpop.f32.mrb[0].mxu0
  %v288 = vadd.f32 0.0, %v287
  %v289 = vpop.f32.mrb[0].mxu0
  %290 = vmatprep.mubr.f32.mxu0 0.0
  %291 = vmatmul.mubr.f32.gmra.mrb[0].mxu0 %v158
  %v292 = vpop.f32.mrb[0].mxu0
  %v293 = vadd.f32 0.0, %v292
  %v294 = vpop.f32.mrb[0].mxu0
  %295 = vmatprep.mubr.f32.mxu0 0.0
  %296 = vmatmul.mubr.f32.gmra.mrb[0].mxu0 %v160
  %v297 = vpop.f32.mrb[0].mxu0
  %v298 = vadd.f32 0.0, %v297
  %v299 = vpop.f32.mrb[0].mxu0
  %300 = vmatprep.mubr.f32.mxu0 0.0
  %301 = vmatmul.mubr.f32.gmra.mrb[0].mxu0 %v162
  %v302 = vpop.f32.mrb[0].mxu0
  %v303 = vadd.f32 0.0, %v302
  %v304 = vpop.f32.mrb[0].mxu0
  %305 = vmatprep.mubr.f32.mxu0 0.0
  %306 = vmatmul.mubr.f32.gmra.mrb[0].mxu0 %v164
  %v307 = vpop.f32.mrb[0].mxu0
  %v308 = vadd.f32 0.0, %v307
  %v309 = vpop.f32.mrb[0].mxu0
  %310 = vdwg.mxu0
  %v311 = vsel %vm133, %v11, 0
  %v313 = vsel %vm133, %v13, 0
  %v315 = vsel %vm133, %v15, 0
  %v317 = vsel %vm133, %v17, 0
  %v319 = vsel %vm133, %v19, 0
  %v321 = vsel %vm133, %v21, 0
  %v323 = vsel %vm133, %v23, 0
  %v325 = vsel %vm133, %v25, 0
  %v327 = vsel %vm133, %v29, 0
  %v329 = vsel %vm133, %v31, 0
  %v331 = vsel %vm133, %v33, 0
  %v333 = vsel %vm133, %v35, 0
  %v335 = vsel %vm133, %v37, 0
  %v337 = vsel %vm133, %v39, 0
  %v339 = vsel %vm133, %v41, 0
  %v341 = vsel %vm133, %v43, 0
  %343 = vmatprep.subr.mxu0 0.0
  %344 = vmatpush1.msra.mxu0 %v47
  %345 = vmatprep.subr.mxu0 0.0
  %346 = vmatpush1.msra.mxu0 %v48
  %347 = vmatprep.subr.mxu0 0.0
  %348 = vmatpush1.msra.mxu0 0.0
  %349 = vmatprep.subr.mxu0 0.0
  %350 = vmatpush1.msra.mxu0 0.0
  %351 = vmatprep.subr.mxu0 0.0
  %352 = vmatpush1.msra.mxu0 0.0
  %353 = vmatprep.subr.mxu0 0.0
  %354 = vmatpush1.msra.mxu0 0.0
  %355 = vmatprep.subr.mxu0 0.0
  %356 = vmatpush1.msra.mxu0 0.0
  %357 = vmatprep.subr.mxu0 0.0
  %358 = vmatpush1.msra.mxu0 0.0
  %359 = vmatprep.subr.mxu0 0.0
  %360 = vmatpush1.msra.mxu0 0.0
  %361 = vmatprep.subr.mxu0 0.0
  %362 = vmatpush1.msra.mxu0 0.0
  %363 = vmatprep.subr.mxu0 0.0
  %364 = vmatpush1.msra.mxu0 0.0
  %365 = vmatprep.subr.mxu0 0.0
  %366 = vmatpush1.msra.mxu0 0.0
  %367 = vmatprep.subr.mxu0 0.0
  %368 = vmatpush1.msra.mxu0 0.0
  %369 = vmatprep.subr.mxu0 0.0
  %370 = vmatpush1.msra.mxu0 0.0
  %371 = vmatprep.subr.mxu0 0.0
  %372 = vmatpush1.msra.mxu0 0.0
  %373 = vmatprep.subr.mxu0 0.0
  %374 = vmatpush1.msra.mxu0 0.0
  %375 = vmatprep.subr.mxu0 0.0
  %376 = vmatpush1.msra.mxu0 0.0
  %377 = vmatprep.subr.mxu0 0.0
  %378 = vmatpush1.msra.mxu0 0.0
  %379 = vmatprep.subr.mxu0 0.0
  %380 = vmatpush1.msra.mxu0 0.0
  %381 = vmatprep.subr.mxu0 0.0
  %382 = vmatpush1.msra.mxu0 0.0
  %383 = vmatprep.subr.mxu0 0.0
  %384 = vmatpush1.msra.mxu0 0.0
  %385 = vmatprep.subr.mxu0 0.0
  %386 = vmatpush1.msra.mxu0 0.0
  %387 = vmatprep.subr.mxu0 0.0
  %388 = vmatpush1.msra.mxu0 0.0
  %389 = vmatprep.subr.mxu0 0.0
  %390 = vmatpush1.msra.mxu0 0.0
  %391 = vmatprep.subr.mxu0 0.0
  %392 = vmatpush1.msra.mxu0 0.0
  %393 = vmatprep.subr.mxu0 0.0
  %394 = vmatpush1.msra.mxu0 0.0
  %395 = vmatprep.subr.mxu0 0.0
  %396 = vmatpush1.msra.mxu0 0.0
  %397 = vmatprep.subr.mxu0 0.0
  %398 = vmatpush1.msra.mxu0 0.0
  %399 = vmatprep.subr.mxu0 0.0
  %400 = vmatpush1.msra.mxu0 0.0
  %401 = vmatprep.subr.mxu0 0.0
  %402 = vmatpush1.msra.mxu0 0.0
  %403 = vmatprep.subr.mxu0 0.0
  %404 = vmatpush1.msra.mxu0 0.0
  %405 = vmatprep.subr.mxu0 0.0
  %406 = vmatpush1.msra.mxu0 0.0
  %407 = vmatprep.mubr.f32.mxu0 0.0
  %408 = vmatmul.mubr.f32.gmra.mrb[0].mxu0 %v311
  %v409 = vpop.f32.mrb[0].mxu0
  %v410 = vadd.f32 %v233, %v409
  %v411 = vpop.f32.mrb[0].mxu0
  %412 = vmatprep.mubr.f32.mxu0 0.0
  %413 = vmatmul.mubr.f32.gmra.mrb[0].mxu0 %v313
  %v414 = vpop.f32.mrb[0].mxu0
  %v415 = vadd.f32 %v238, %v414
  %v416 = vpop.f32.mrb[0].mxu0
  %417 = vmatprep.mubr.f32.mxu0 0.0
  %418 = vmatmul.mubr.f32.gmra.mrb[0].mxu0 %v315
  %v419 = vpop.f32.mrb[0].mxu0
  %v420 = vadd.f32 %v243, %v419
  %v421 = vpop.f32.mrb[0].mxu0
  %422 = vmatprep.mubr.f32.mxu0 0.0
  %423 = vmatmul.mubr.f32.gmra.mrb[0].mxu0 %v317
  %v424 = vpop.f32.mrb[0].mxu0
  %v425 = vadd.f32 %v248, %v424
  %v426 = vpop.f32.mrb[0].mxu0
  %427 = vmatprep.mubr.f32.mxu0 0.0
  %428 = vmatmul.mubr.f32.gmra.mrb[0].mxu0 %v319
  %v429 = vpop.f32.mrb[0].mxu0
  %v430 = vadd.f32 %v253, %v429
  %v431 = vpop.f32.mrb[0].mxu0
  %432 = vmatprep.mubr.f32.mxu0 0.0
  %433 = vmatmul.mubr.f32.gmra.mrb[0].mxu0 %v321
  %v434 = vpop.f32.mrb[0].mxu0
  %v435 = vadd.f32 %v258, %v434
  %v436 = vpop.f32.mrb[0].mxu0
  %437 = vmatprep.mubr.f32.mxu0 0.0
  %438 = vmatmul.mubr.f32.gmra.mrb[0].mxu0 %v323
  %v439 = vpop.f32.mrb[0].mxu0
  %v440 = vadd.f32 %v263, %v439
  %v441 = vpop.f32.mrb[0].mxu0
  %442 = vmatprep.mubr.f32.mxu0 0.0
  %443 = vmatmul.mubr.f32.gmra.mrb[0].mxu0 %v325
  %v444 = vpop.f32.mrb[0].mxu0
  %v445 = vadd.f32 %v268, %v444
  %v446 = vpop.f32.mrb[0].mxu0
  %447 = vmatprep.mubr.f32.mxu0 0.0
  %448 = vmatmul.mubr.f32.gmra.mrb[0].mxu0 %v327
  %v449 = vpop.f32.mrb[0].mxu0
  %v450 = vadd.f32 %v273, %v449
  %v451 = vpop.f32.mrb[0].mxu0
  %452 = vmatprep.mubr.f32.mxu0 0.0
  %453 = vmatmul.mubr.f32.gmra.mrb[0].mxu0 %v329
  %v454 = vpop.f32.mrb[0].mxu0
  %v455 = vadd.f32 %v278, %v454
  %v456 = vpop.f32.mrb[0].mxu0
  %457 = vmatprep.mubr.f32.mxu0 0.0
  %458 = vmatmul.mubr.f32.gmra.mrb[0].mxu0 %v331
  %v459 = vpop.f32.mrb[0].mxu0
  %v460 = vadd.f32 %v283, %v459
  %v461 = vpop.f32.mrb[0].mxu0
  %462 = vmatprep.mubr.f32.mxu0 0.0
  %463 = vmatmul.mubr.f32.gmra.mrb[0].mxu0 %v333
  %v464 = vpop.f32.mrb[0].mxu0
  %v465 = vadd.f32 %v288, %v464
  %v466 = vpop.f32.mrb[0].mxu0
  %467 = vmatprep.mubr.f32.mxu0 0.0
  %468 = vmatmul.mubr.f32.gmra.mrb[0].mxu0 %v335
  %v469 = vpop.f32.mrb[0].mxu0
  %v470 = vadd.f32 %v293, %v469
  %v471 = vpop.f32.mrb[0].mxu0
  %472 = vmatprep.mubr.f32.mxu0 0.0
  %473 = vmatmul.mubr.f32.gmra.mrb[0].mxu0 %v337
  %v474 = vpop.f32.mrb[0].mxu0
  %v475 = vadd.f32 %v298, %v474
  %v476 = vpop.f32.mrb[0].mxu0
  %477 = vmatprep.mubr.f32.mxu0 0.0
  %478 = vmatmul.mubr.f32.gmra.mrb[0].mxu0 %v339
  %v479 = vpop.f32.mrb[0].mxu0
  %v480 = vadd.f32 %v303, %v479
  %v481 = vpop.f32.mrb[0].mxu0
  %482 = vmatprep.mubr.f32.mxu0 0.0
  %483 = vmatmul.mubr.f32.gmra.mrb[0].mxu0 %v341
  %v484 = vpop.f32.mrb[0].mxu0
  %v485 = vadd.f32 %v308, %v484
  %v486 = vpop.f32.mrb[0].mxu0
  %487 = vdwg.mxu0
  %s488 = scalar_lea.vmem %s1, 32
  %v489 = vld [vmem:[%s488] sm:$0xff]
  %v490 = vld [vmem:[%s488 + $0x8] sm:$0xff]
  %v492 = vsel %vm133, %v27, 0
  %v495 = vsel %vm133, %v45, 0
  %497 = vmatprep.subr.mxu0 0.0
  %498 = vmatpush1.msra.mxu0 %v489
  %499 = vmatprep.subr.mxu0 0.0
  %500 = vmatpush1.msra.mxu0 %v490
  %501 = vmatprep.subr.mxu0 0.0
  %502 = vmatpush1.msra.mxu0 0.0
  %503 = vmatprep.subr.mxu0 0.0
  %504 = vmatpush1.msra.mxu0 0.0
  %505 = vmatprep.subr.mxu0 0.0
  %506 = vmatpush1.msra.mxu0 0.0
  %507 = vmatprep.subr.mxu0 0.0
  %508 = vmatpush1.msra.mxu0 0.0
  %509 = vmatprep.subr.mxu0 0.0
  %510 = vmatpush1.msra.mxu0 0.0
  %511 = vmatprep.subr.mxu0 0.0
  %512 = vmatpush1.msra.mxu0 0.0
  %513 = vmatprep.subr.mxu0 0.0
  %514 = vmatpush1.msra.mxu0 0.0
  %515 = vmatprep.subr.mxu0 0.0
  %516 = vmatpush1.msra.mxu0 0.0
  %517 = vmatprep.subr.mxu0 0.0
  %518 = vmatpush1.msra.mxu0 0.0
  %519 = vmatprep.subr.mxu0 0.0
  %520 = vmatpush1.msra.mxu0 0.0
  %521 = vmatprep.subr.mxu0 0.0
  %522 = vmatpush1.msra.mxu0 0.0
  %523 = vmatprep.subr.mxu0 0.0
  %524 = vmatpush1.msra.mxu0 0.0
  %525 = vmatprep.subr.mxu0 0.0
  %526 = vmatpush1.msra.mxu0 0.0
  %527 = vmatprep.subr.mxu0 0.0
  %528 = vmatpush1.msra.mxu0 0.0
  %529 = vmatprep.subr.mxu0 0.0
  %530 = vmatpush1.msra.mxu0 0.0
  %531 = vmatprep.subr.mxu0 0.0
  %532 = vmatpush1.msra.mxu0 0.0
  %533 = vmatprep.subr.mxu0 0.0
  %534 = vmatpush1.msra.mxu0 0.0
  %535 = vmatprep.subr.mxu0 0.0
  %536 = vmatpush1.msra.mxu0 0.0
  %537 = vmatprep.subr.mxu0 0.0
  %538 = vmatpush1.msra.mxu0 0.0
  %539 = vmatprep.subr.mxu0 0.0
  %540 = vmatpush1.msra.mxu0 0.0
  %541 = vmatprep.subr.mxu0 0.0
  %542 = vmatpush1.msra.mxu0 0.0
  %543 = vmatprep.subr.mxu0 0.0
  %544 = vmatpush1.msra.mxu0 0.0
  %545 = vmatprep.subr.mxu0 0.0
  %546 = vmatpush1.msra.mxu0 0.0
  %547 = vmatprep.subr.mxu0 0.0
  %548 = vmatpush1.msra.mxu0 0.0
  %549 = vmatprep.subr.mxu0 0.0
  %550 = vmatpush1.msra.mxu0 0.0
  %551 = vmatprep.subr.mxu0 0.0
  %552 = vmatpush1.msra.mxu0 0.0
  %553 = vmatprep.subr.mxu0 0.0
  %554 = vmatpush1.msra.mxu0 0.0
  %555 = vmatprep.subr.mxu0 0.0
  %556 = vmatpush1.msra.mxu0 0.0
  %557 = vmatprep.subr.mxu0 0.0
  %558 = vmatpush1.msra.mxu0 0.0
  %559 = vmatprep.subr.mxu0 0.0
  %560 = vmatpush1.msra.mxu0 0.0
  %561 = vmatprep.mubr.f32.mxu0 0.0
  %562 = vmatmul.mubr.f32.gmra.mrb[0].mxu0 %v313
  %v563 = vpop.f32.mrb[0].mxu0
  %v564 = vadd.f32 0.0, %v563
  %v565 = vpop.f32.mrb[0].mxu0
  %566 = vmatprep.mubr.f32.mxu0 0.0
  %567 = vmatmul.mubr.f32.gmra.mrb[0].mxu0 %v315
  %v568 = vpop.f32.mrb[0].mxu0
  %v569 = vadd.f32 0.0, %v568
  %v570 = vpop.f32.mrb[0].mxu0
  %571 = vmatprep.mubr.f32.mxu0 0.0
  %572 = vmatmul.mubr.f32.gmra.mrb[0].mxu0 %v317
  %v573 = vpop.f32.mrb[0].mxu0
  %v574 = vadd.f32 0.0, %v573
  %v575 = vpop.f32.mrb[0].mxu0
  %576 = vmatprep.mubr.f32.mxu0 0.0
  %577 = vmatmul.mubr.f32.gmra.mrb[0].mxu0 %v319
  %v578 = vpop.f32.mrb[0].mxu0
  %v579 = vadd.f32 0.0, %v578
  %v580 = vpop.f32.mrb[0].mxu0
  %581 = vmatprep.mubr.f32.mxu0 0.0
  %582 = vmatmul.mubr.f32.gmra.mrb[0].mxu0 %v321
  %v583 = vpop.f32.mrb[0].mxu0
  %v584 = vadd.f32 0.0, %v583
  %v585 = vpop.f32.mrb[0].mxu0
  %586 = vmatprep.mubr.f32.mxu0 0.0
  %587 = vmatmul.mubr.f32.gmra.mrb[0].mxu0 %v323
  %v588 = vpop.f32.mrb[0].mxu0
  %v589 = vadd.f32 0.0, %v588
  %v590 = vpop.f32.mrb[0].mxu0
  %591 = vmatprep.mubr.f32.mxu0 0.0
  %592 = vmatmul.mubr.f32.gmra.mrb[0].mxu0 %v325
  %v593 = vpop.f32.mrb[0].mxu0
  %v594 = vadd.f32 0.0, %v593
  %v595 = vpop.f32.mrb[0].mxu0
  %596 = vmatprep.mubr.f32.mxu0 0.0
  %597 = vmatmul.mubr.f32.gmra.mrb[0].mxu0 %v492
  %v598 = vpop.f32.mrb[0].mxu0
  %v599 = vadd.f32 0.0, %v598
  %v600 = vpop.f32.mrb[0].mxu0
  %601 = vmatprep.mubr.f32.mxu0 0.0
  %602 = vmatmul.mubr.f32.gmra.mrb[0].mxu0 %v329
  %v603 = vpop.f32.mrb[0].mxu0
  %v604 = vadd.f32 0.0, %v603
  %v605 = vpop.f32.mrb[0].mxu0
  %606 = vmatprep.mubr.f32.mxu0 0.0
  %607 = vmatmul.mubr.f32.gmra.mrb[0].mxu0 %v331
  %v608 = vpop.f32.mrb[0].mxu0
  %v609 = vadd.f32 0.0, %v608
  %v610 = vpop.f32.mrb[0].mxu0
  %611 = vmatprep.mubr.f32.mxu0 0.0
  %612 = vmatmul.mubr.f32.gmra.mrb[0].mxu0 %v333
  %v613 = vpop.f32.mrb[0].mxu0
  %v614 = vadd.f32 0.0, %v613
  %v615 = vpop.f32.mrb[0].mxu0
  %616 = vmatprep.mubr.f32.mxu0 0.0
  %617 = vmatmul.mubr.f32.gmra.mrb[0].mxu0 %v335
  %v618 = vpop.f32.mrb[0].mxu0
  %v619 = vadd.f32 0.0, %v618
  %v620 = vpop.f32.mrb[0].mxu0
  %621 = vmatprep.mubr.f32.mxu0 0.0
  %622 = vmatmul.mubr.f32.gmra.mrb[0].mxu0 %v337
  %v623 = vpop.f32.mrb[0].mxu0
  %v624 = vadd.f32 0.0, %v623
  %v625 = vpop.f32.mrb[0].mxu0
  %626 = vmatprep.mubr.f32.mxu0 0.0
  %627 = vmatmul.mubr.f32.gmra.mrb[0].mxu0 %v339
  %v628 = vpop.f32.mrb[0].mxu0
  %v629 = vadd.f32 0.0, %v628
  %v630 = vpop.f32.mrb[0].mxu0
  %631 = vmatprep.mubr.f32.mxu0 0.0
  %632 = vmatmul.mubr.f32.gmra.mrb[0].mxu0 %v341
  %v633 = vpop.f32.mrb[0].mxu0
  %v634 = vadd.f32 0.0, %v633
  %v635 = vpop.f32.mrb[0].mxu0
  %636 = vmatprep.mubr.f32.mxu0 0.0
  %637 = vmatmul.mubr.f32.gmra.mrb[0].mxu0 %v495
  %v638 = vpop.f32.mrb[0].mxu0
  %v639 = vadd.f32 0.0, %v638
  %v640 = vpop.f32.mrb[0].mxu0
  %641 = vdwg.mxu0
  %v642 = vadd.f32 %v410, %v564
  %v643 = vadd.f32 %v415, %v569
  %v644 = vadd.f32 %v420, %v574
  %v645 = vadd.f32 %v425, %v579
  %v646 = vadd.f32 %v430, %v584
  %v647 = vadd.f32 %v435, %v589
  %v648 = vadd.f32 %v440, %v594
  %v649 = vadd.f32 %v445, %v599
  %v650 = vadd.f32 %v450, %v604
  %v651 = vadd.f32 %v455, %v609
  %v652 = vadd.f32 %v460, %v614
  %v653 = vadd.f32 %v465, %v619
  %v654 = vadd.f32 %v470, %v624
  %v655 = vadd.f32 %v475, %v629
  %v656 = vadd.f32 %v480, %v634
  %v657 = vadd.f32 %v485, %v639
  %v660 = vrot.slane %v27, 1
  %v661 = vrot.slane %v28, 1
  %v662 = vsel %vm81, %v660, %v661
  %v663 = vrot.slane %v45, 1
  %v664 = vrot.slane %v46, 1
  %v665 = vsel %vm81, %v663, %v664
  %s666 = scalar_lea.vmem %s1, 48
  %v667 = vld [vmem:[%s666] sm:$0xff]
  %v668 = vld [vmem:[%s666 + $0x8] sm:$0xff]
  %v669 = vsel %vm133, %v662, 0
  %v671 = vsel %vm133, %v665, 0
  %673 = vmatprep.subr.mxu0 0.0
  %674 = vmatpush1.msra.mxu0 %v667
  %675 = vmatprep.subr.mxu0 0.0
  %676 = vmatpush1.msra.mxu0 %v668
  %677 = vmatprep.subr.mxu0 0.0
  %678 = vmatpush1.msra.mxu0 0.0
  %679 = vmatprep.subr.mxu0 0.0
  %680 = vmatpush1.msra.mxu0 0.0
  %681 = vmatprep.subr.mxu0 0.0
  %682 = vmatpush1.msra.mxu0 0.0
  %683 = vmatprep.subr.mxu0 0.0
  %684 = vmatpush1.msra.mxu0 0.0
  %685 = vmatprep.subr.mxu0 0.0
  %686 = vmatpush1.msra.mxu0 0.0
  %687 = vmatprep.subr.mxu0 0.0
  %688 = vmatpush1.msra.mxu0 0.0
  %689 = vmatprep.subr.mxu0 0.0
  %690 = vmatpush1.msra.mxu0 0.0
  %691 = vmatprep.subr.mxu0 0.0
  %692 = vmatpush1.msra.mxu0 0.0
  %693 = vmatprep.subr.mxu0 0.0
  %694 = vmatpush1.msra.mxu0 0.0
  %695 = vmatprep.subr.mxu0 0.0
  %696 = vmatpush1.msra.mxu0 0.0
  %697 = vmatprep.subr.mxu0 0.0
  %698 = vmatpush1.msra.mxu0 0.0
  %699 = vmatprep.subr.mxu0 0.0
  %700 = vmatpush1.msra.mxu0 0.0
  %701 = vmatprep.subr.mxu0 0.0
  %702 = vmatpush1.msra.mxu0 0.0
  %703 = vmatprep.subr.mxu0 0.0
  %704 = vmatpush1.msra.mxu0 0.0
  %705 = vmatprep.subr.mxu0 0.0
  %706 = vmatpush1.msra.mxu0 0.0
  %707 = vmatprep.subr.mxu0 0.0
  %708 = vmatpush1.msra.mxu0 0.0
  %709 = vmatprep.subr.mxu0 0.0
  %710 = vmatpush1.msra.mxu0 0.0
  %711 = vmatprep.subr.mxu0 0.0
  %712 = vmatpush1.msra.mxu0 0.0
  %713 = vmatprep.subr.mxu0 0.0
  %714 = vmatpush1.msra.mxu0 0.0
  %715 = vmatprep.subr.mxu0 0.0
  %716 = vmatpush1.msra.mxu0 0.0
  %717 = vmatprep.subr.mxu0 0.0
  %718 = vmatpush1.msra.mxu0 0.0
  %719 = vmatprep.subr.mxu0 0.0
  %720 = vmatpush1.msra.mxu0 0.0
  %721 = vmatprep.subr.mxu0 0.0
  %722 = vmatpush1.msra.mxu0 0.0
  %723 = vmatprep.subr.mxu0 0.0
  %724 = vmatpush1.msra.mxu0 0.0
  %725 = vmatprep.subr.mxu0 0.0
  %726 = vmatpush1.msra.mxu0 0.0
  %727 = vmatprep.subr.mxu0 0.0
  %728 = vmatpush1.msra.mxu0 0.0
  %729 = vmatprep.subr.mxu0 0.0
  %730 = vmatpush1.msra.mxu0 0.0
  %731 = vmatprep.subr.mxu0 0.0
  %732 = vmatpush1.msra.mxu0 0.0
  %733 = vmatprep.subr.mxu0 0.0
  %734 = vmatpush1.msra.mxu0 0.0
  %735 = vmatprep.subr.mxu0 0.0
  %736 = vmatpush1.msra.mxu0 0.0
  %737 = vmatprep.mubr.f32.mxu0 0.0
  %738 = vmatmul.mubr.f32.gmra.mrb[0].mxu0 %v136
  %v739 = vpop.f32.mrb[0].mxu0
  %v740 = vadd.f32 0.0, %v739
  %v741 = vpop.f32.mrb[0].mxu0
  %742 = vmatprep.mubr.f32.mxu0 0.0
  %743 = vmatmul.mubr.f32.gmra.mrb[0].mxu0 %v138
  %v744 = vpop.f32.mrb[0].mxu0
  %v745 = vadd.f32 0.0, %v744
  %v746 = vpop.f32.mrb[0].mxu0
  %747 = vmatprep.mubr.f32.mxu0 0.0
  %748 = vmatmul.mubr.f32.gmra.mrb[0].mxu0 %v140
  %v749 = vpop.f32.mrb[0].mxu0
  %v750 = vadd.f32 0.0, %v749
  %v751 = vpop.f32.mrb[0].mxu0
  %752 = vmatprep.mubr.f32.mxu0 0.0
  %753 = vmatmul.mubr.f32.gmra.mrb[0].mxu0 %v142
  %v754 = vpop.f32.mrb[0].mxu0
  %v755 = vadd.f32 0.0, %v754
  %v756 = vpop.f32.mrb[0].mxu0
  %757 = vmatprep.mubr.f32.mxu0 0.0
  %758 = vmatmul.mubr.f32.gmra.mrb[0].mxu0 %v144
  %v759 = vpop.f32.mrb[0].mxu0
  %v760 = vadd.f32 0.0, %v759
  %v761 = vpop.f32.mrb[0].mxu0
  %762 = vmatprep.mubr.f32.mxu0 0.0
  %763 = vmatmul.mubr.f32.gmra.mrb[0].mxu0 %v146
  %v764 = vpop.f32.mrb[0].mxu0
  %v765 = vadd.f32 0.0, %v764
  %v766 = vpop.f32.mrb[0].mxu0
  %767 = vmatprep.mubr.f32.mxu0 0.0
  %768 = vmatmul.mubr.f32.gmra.mrb[0].mxu0 %v148
  %v769 = vpop.f32.mrb[0].mxu0
  %v770 = vadd.f32 0.0, %v769
  %v771 = vpop.f32.mrb[0].mxu0
  %772 = vmatprep.mubr.f32.mxu0 0.0
  %773 = vmatmul.mubr.f32.gmra.mrb[0].mxu0 %v669
  %v774 = vpop.f32.mrb[0].mxu0
  %v775 = vadd.f32 0.0, %v774
  %v776 = vpop.f32.mrb[0].mxu0
  %777 = vmatprep.mubr.f32.mxu0 0.0
  %778 = vmatmul.mubr.f32.gmra.mrb[0].mxu0 %v152
  %v779 = vpop.f32.mrb[0].mxu0
  %v780 = vadd.f32 0.0, %v779
  %v781 = vpop.f32.mrb[0].mxu0
  %782 = vmatprep.mubr.f32.mxu0 0.0
  %783 = vmatmul.mubr.f32.gmra.mrb[0].mxu0 %v154
  %v784 = vpop.f32.mrb[0].mxu0
  %v785 = vadd.f32 0.0, %v784
  %v786 = vpop.f32.mrb[0].mxu0
  %787 = vmatprep.mubr.f32.mxu0 0.0
  %788 = vmatmul.mubr.f32.gmra.mrb[0].mxu0 %v156
  %v789 = vpop.f32.mrb[0].mxu0
  %v790 = vadd.f32 0.0, %v789
  %v791 = vpop.f32.mrb[0].mxu0
  %792 = vmatprep.mubr.f32.mxu0 0.0
  %793 = vmatmul.mubr.f32.gmra.mrb[0].mxu0 %v158
  %v794 = vpop.f32.mrb[0].mxu0
  %v795 = vadd.f32 0.0, %v794
  %v796 = vpop.f32.mrb[0].mxu0
  %797 = vmatprep.mubr.f32.mxu0 0.0
  %798 = vmatmul.mubr.f32.gmra.mrb[0].mxu0 %v160
  %v799 = vpop.f32.mrb[0].mxu0
  %v800 = vadd.f32 0.0, %v799
  %v801 = vpop.f32.mrb[0].mxu0
  %802 = vmatprep.mubr.f32.mxu0 0.0
  %803 = vmatmul.mubr.f32.gmra.mrb[0].mxu0 %v162
  %v804 = vpop.f32.mrb[0].mxu0
  %v805 = vadd.f32 0.0, %v804
  %v806 = vpop.f32.mrb[0].mxu0
  %807 = vmatprep.mubr.f32.mxu0 0.0
  %808 = vmatmul.mubr.f32.gmra.mrb[0].mxu0 %v164
  %v809 = vpop.f32.mrb[0].mxu0
  %v810 = vadd.f32 0.0, %v809
  %v811 = vpop.f32.mrb[0].mxu0
  %812 = vmatprep.mubr.f32.mxu0 0.0
  %813 = vmatmul.mubr.f32.gmra.mrb[0].mxu0 %v671
  %v814 = vpop.f32.mrb[0].mxu0
  %v815 = vadd.f32 0.0, %v814
  %v816 = vpop.f32.mrb[0].mxu0
  %817 = vdwg.mxu0
  %v818 = vadd.f32 %v642, %v740
  %v819 = vadd.f32 %v643, %v745
  %v820 = vadd.f32 %v644, %v750
  %v821 = vadd.f32 %v645, %v755
  %v822 = vadd.f32 %v646, %v760
  %v823 = vadd.f32 %v647, %v765
  %v824 = vadd.f32 %v648, %v770
  %v825 = vadd.f32 %v649, %v775
  %v826 = vadd.f32 %v650, %v780
  %v827 = vadd.f32 %v651, %v785
  %v828 = vadd.f32 %v652, %v790
  %v829 = vadd.f32 %v653, %v795
  %v830 = vadd.f32 %v654, %v800
  %v831 = vadd.f32 %v655, %v805
  %v832 = vadd.f32 %v656, %v810
  %v833 = vadd.f32 %v657, %v815
  %vm834 = vcmask 64512
  %v835 = vsel %vm834, %v818, 0.0
  %v836 = vsel %vm834, %v819, 0.0
  %v837 = vadd.f32 %v835, %v836
  %v838 = vsel %vm834, %v820, 0.0
  %v839 = vadd.f32 %v837, %v838
  %v840 = vsel %vm834, %v821, 0.0
  %v841 = vadd.f32 %v839, %v840
  %v842 = vsel %vm834, %v822, 0.0
  %v843 = vadd.f32 %v841, %v842
  %v844 = vsel %vm834, %v823, 0.0
  %v845 = vadd.f32 %v843, %v844
  %v846 = vsel %vm834, %v824, 0.0
  %v847 = vadd.f32 %v845, %v846
  %v848 = vsel %vm834, %v825, 0.0
  %v849 = vadd.f32 %v847, %v848
  %v850 = vrot.slane %v849, 4
  %v851 = vadd.f32 %v849, %v850
  %v852 = vrot.slane %v851, 2
  %v853 = vadd.f32 %v851, %v852
  %v854 = vrot.slane %v853, 1
  %v855 = vadd.f32 %v853, %v854
  %v856 = vsel %vm834, %v826, 0.0
  %v857 = vsel %vm834, %v827, 0.0
  %v858 = vadd.f32 %v856, %v857
  %v859 = vsel %vm834, %v828, 0.0
  %v860 = vadd.f32 %v858, %v859
  %v861 = vsel %vm834, %v829, 0.0
  %v862 = vadd.f32 %v860, %v861
  %v863 = vsel %vm834, %v830, 0.0
  %v864 = vadd.f32 %v862, %v863
  %v865 = vsel %vm834, %v831, 0.0
  %v866 = vadd.f32 %v864, %v865
  %v867 = vsel %vm834, %v832, 0.0
  %v868 = vadd.f32 %v866, %v867
  %v869 = vsel %vm834, %v833, 0.0
  %v870 = vadd.f32 %v868, %v869
  %v871 = vrot.slane %v870, 4
  %v872 = vadd.f32 %v870, %v871
  %v873 = vrot.slane %v872, 2
  %v874 = vadd.f32 %v872, %v873
  %v875 = vrot.slane %v874, 1
  %v876 = vadd.f32 %v874, %v875
  %v877 = vrcp.pop 64.0
  %v878 = vmul.f32 %v855, %v877
  %v879 = vmul.f32 %v876, %v877
  %v880 = vsub.f32 %v818, %v878
  %v881 = vsub.f32 %v819, %v878
  %v882 = vsub.f32 %v820, %v878
  %v883 = vsub.f32 %v821, %v878
  %v884 = vsub.f32 %v822, %v878
  %v885 = vsub.f32 %v823, %v878
  %v886 = vsub.f32 %v824, %v878
  %v887 = vsub.f32 %v825, %v878
  %v888 = vsub.f32 %v826, %v879
  %v889 = vsub.f32 %v827, %v879
  %v890 = vsub.f32 %v828, %v879
  %v891 = vsub.f32 %v829, %v879
  %v892 = vsub.f32 %v830, %v879
  %v893 = vsub.f32 %v831, %v879
  %v894 = vsub.f32 %v832, %v879
  %v895 = vsub.f32 %v833, %v879
  %v896 = vmul.f32 %v880, %v880
  %v897 = vmul.f32 %v881, %v881
  %v898 = vmul.f32 %v882, %v882
  %v899 = vmul.f32 %v883, %v883
  %v900 = vmul.f32 %v884, %v884
  %v901 = vmul.f32 %v885, %v885
  %v902 = vmul.f32 %v886, %v886
  %v903 = vmul.f32 %v887, %v887
  %v904 = vmul.f32 %v888, %v888
  %v905 = vmul.f32 %v889, %v889
  %v906 = vmul.f32 %v890, %v890
  %v907 = vmul.f32 %v891, %v891
  %v908 = vmul.f32 %v892, %v892
  %v909 = vmul.f32 %v893, %v893
  %v910 = vmul.f32 %v894, %v894
  %v911 = vmul.f32 %v895, %v895
  %v912 = vsel %vm834, %v896, 0.0
  %v913 = vsel %vm834, %v897, 0.0
  %v914 = vadd.f32 %v912, %v913
  %v915 = vsel %vm834, %v898, 0.0
  %v916 = vadd.f32 %v914, %v915
  %v917 = vsel %vm834, %v899, 0.0
  %v918 = vadd.f32 %v916, %v917
  %v919 = vsel %vm834, %v900, 0.0
  %v920 = vadd.f32 %v918, %v919
  %v921 = vsel %vm834, %v901, 0.0
  %v922 = vadd.f32 %v920, %v921
  %v923 = vsel %vm834, %v902, 0.0
  %v924 = vadd.f32 %v922, %v923
  %v925 = vsel %vm834, %v903, 0.0
  %v926 = vadd.f32 %v924, %v925
  %v927 = vrot.slane %v926, 4
  %v928 = vadd.f32 %v926, %v927
  %v929 = vrot.slane %v928, 2
  %v930 = vadd.f32 %v928, %v929
  %v931 = vrot.slane %v930, 1
  %v932 = vadd.f32 %v930, %v931
  %v933 = vsel %vm834, %v904, 0.0
  %v934 = vsel %vm834, %v905, 0.0
  %v935 = vadd.f32 %v933, %v934
  %v936 = vsel %vm834, %v906, 0.0
  %v937 = vadd.f32 %v935, %v936
  %v938 = vsel %vm834, %v907, 0.0
  %v939 = vadd.f32 %v937, %v938
  %v940 = vsel %vm834, %v908, 0.0
  %v941 = vadd.f32 %v939, %v940
  %v942 = vsel %vm834, %v909, 0.0
  %v943 = vadd.f32 %v941, %v942
  %v944 = vsel %vm834, %v910, 0.0
  %v945 = vadd.f32 %v943, %v944
  %v946 = vsel %vm834, %v911, 0.0
  %v947 = vadd.f32 %v945, %v946
  %v948 = vrot.slane %v947, 4
  %v949 = vadd.f32 %v947, %v948
  %v950 = vrot.slane %v949, 2
  %v951 = vadd.f32 %v949, %v950
  %v952 = vrot.slane %v951, 1
  %v953 = vadd.f32 %v951, %v952
  %v954 = vmul.f32 %v932, %v877
  %v955 = vmul.f32 %v953, %v877
  %v956 = vadd.f32 %v954, 1e-05
  %v957 = vadd.f32 %v955, 1e-05
  %v958 = vrsqrt.pop %v956
  %v959 = vrsqrt.pop %v957
  %v960 = vmul.f32 %v880, %v958
  %v961 = vmul.f32 %v881, %v958
  %v962 = vmul.f32 %v882, %v958
  %v963 = vmul.f32 %v883, %v958
  %v964 = vmul.f32 %v884, %v958
  %v965 = vmul.f32 %v885, %v958
  %v966 = vmul.f32 %v886, %v958
  %v967 = vmul.f32 %v887, %v958
  %v968 = vmul.f32 %v888, %v959
  %v969 = vmul.f32 %v889, %v959
  %v970 = vmul.f32 %v890, %v959
  %v971 = vmul.f32 %v891, %v959
  %v972 = vmul.f32 %v892, %v959
  %v973 = vmul.f32 %v893, %v959
  %v974 = vmul.f32 %v894, %v959
  %v975 = vmul.f32 %v895, %v959
  %vm976 = vcmp.ge.f32.partialorder %v960, 0.0
  %vm977 = vcmp.ge.f32.partialorder %v961, 0.0
  %vm978 = vcmp.ge.f32.partialorder %v962, 0.0
  %vm979 = vcmp.ge.f32.partialorder %v963, 0.0
  %vm980 = vcmp.ge.f32.partialorder %v964, 0.0
  %vm981 = vcmp.ge.f32.partialorder %v965, 0.0
  %vm982 = vcmp.ge.f32.partialorder %v966, 0.0
  %vm983 = vcmp.ge.f32.partialorder %v967, 0.0
  %vm984 = vcmp.ge.f32.partialorder %v968, 0.0
  %vm985 = vcmp.ge.f32.partialorder %v969, 0.0
  %vm986 = vcmp.ge.f32.partialorder %v970, 0.0
  %vm987 = vcmp.ge.f32.partialorder %v971, 0.0
  %vm988 = vcmp.ge.f32.partialorder %v972, 0.0
  %vm989 = vcmp.ge.f32.partialorder %v973, 0.0
  %vm990 = vcmp.ge.f32.partialorder %v974, 0.0
  %vm991 = vcmp.ge.f32.partialorder %v975, 0.0
  %v992 = vmul.f32 %v960, 0.2
  %v993 = vmul.f32 %v961, 0.2
  %v994 = vmul.f32 %v962, 0.2
  %v995 = vmul.f32 %v963, 0.2
  %v996 = vmul.f32 %v964, 0.2
  %v997 = vmul.f32 %v965, 0.2
  %v998 = vmul.f32 %v966, 0.2
  %v999 = vmul.f32 %v967, 0.2
  %v1000 = vmul.f32 %v968, 0.2
  %v1001 = vmul.f32 %v969, 0.2
  %v1002 = vmul.f32 %v970, 0.2
  %v1003 = vmul.f32 %v971, 0.2
  %v1004 = vmul.f32 %v972, 0.2
  %v1005 = vmul.f32 %v973, 0.2
  %v1006 = vmul.f32 %v974, 0.2
  %v1007 = vmul.f32 %v975, 0.2
  %v1008 = vsel %vm976, %v960, %v992
  %v1009 = vsel %vm977, %v961, %v993
  %v1010 = vsel %vm978, %v962, %v994
  %v1011 = vsel %vm979, %v963, %v995
  %v1012 = vsel %vm980, %v964, %v996
  %v1013 = vsel %vm981, %v965, %v997
  %v1014 = vsel %vm982, %v966, %v998
  %v1015 = vsel %vm983, %v967, %v999
  %v1016 = vsel %vm984, %v968, %v1000
  %v1017 = vsel %vm985, %v969, %v1001
  %v1018 = vsel %vm986, %v970, %v1002
  %v1019 = vsel %vm987, %v971, %v1003
  %v1020 = vsel %vm988, %v972, %v1004
  %v1021 = vsel %vm989, %v973, %v1005
  %v1022 = vsel %vm990, %v974, %v1006
  %v1023 = vsel %vm991, %v975, %v1007
  %1024 = vxpose.xlu0.b32.start [1/16] %v1008, 128
  %1025 = vxpose.xlu0.b32.cont [2/16] %v1009, 128
  %1026 = vxpose.xlu0.b32.cont [3/16] %v1010, 128
  %1027 = vxpose.xlu0.b32.cont [4/16] %v1011, 128
  %1028 = vxpose.xlu0.b32.cont [5/16] %v1012, 128
  %1029 = vxpose.xlu0.b32.cont [6/16] %v1013, 128
  %1030 = vxpose.xlu0.b32.cont [7/16] %v1014, 128
  %1031 = vxpose.xlu0.b32.cont [8/16] %v1015, 128
  %1032 = vxpose.xlu0.b32.cont [9/16] %v1016, 128
  %1033 = vxpose.xlu0.b32.cont [10/16] %v1017, 128
  %1034 = vxpose.xlu0.b32.cont [11/16] %v1018, 128
  %1035 = vxpose.xlu0.b32.cont [12/16] %v1019, 128
  %1036 = vxpose.xlu0.b32.cont [13/16] %v1020, 128
  %1037 = vxpose.xlu0.b32.cont [14/16] %v1021, 128
  %1038 = vxpose.xlu0.b32.cont [15/16] %v1022, 128
  %1039 = vxpose.xlu0.b32.end [16/16] %v1023, 128
  %v1040 = vpop.trf.xlu0
  %v1041 = vpop.trf.xlu0
  %v1042 = vpop.trf.xlu0
  %v1043 = vpop.trf.xlu0
  %v1044 = vpop.trf.xlu0
  %v1045 = vpop.trf.xlu0
  %v1046 = vpop.trf.xlu0
  %v1047 = vpop.trf.xlu0
  %v1048 = vpop.trf.xlu0
  %v1049 = vpop.trf.xlu0
  %v1050 = vpop.trf.xlu0
  %v1051 = vpop.trf.xlu0
  %v1052 = vpop.trf.xlu0
  %v1053 = vpop.trf.xlu0
  %v1054 = vpop.trf.xlu0
  %v1055 = vpop.trf.xlu0
  %1056 = vst [vmem:[%s2] sm:$0xff] %v1040
  // Predicated region
  $region10: #{encode_block.1} parent=0 // pred_check
    _
  $region11: #{encode_block.1} parent=0 // pred_check_branch
    %1058 = sbr.rel (0) target = $region13
  $region12: #{encode_block.1} parent=0 // pred_region
    _
  $region13: #{encode_block.1} parent=0 // pred_fallthru
    _
  // Predicated region
  $region14: #{encode_block.1} parent=0 // pred_check
    _
  $region15: #{encode_block.1} parent=0 // pred_check_branch
    %1060 = sbr.rel (0) target = $region17
  $region16: #{encode_block.1} parent=0 // pred_region
    _
  $region17: #{encode_block.1} parent=0 // pred_fallthru
    _

</llo_original>
